<compile_context>
chip_gen: v6e
topology: v6e:2x2x1
jax: 0.10.0
libtpu: 0.0.40
codegen_flags: <defaults>
</compile_context>

<pallas_src>
import functools

import jax
import jax.numpy as jnp
from jax.experimental import pallas as pl
from jax.experimental.pallas import tpu as pltpu


def _se_kernel(x_ref, w1_ref, w2_ref, o_ref, *, inv_hw):
    # x_ref/o_ref: (block_b, C, HW_pad) in x's native dtype.
    # w1_ref: (C, Cr) f32, w2_ref: (Cr, C) f32 (resident across the grid).
    x = x_ref[...]

    # Squeeze: spatial mean with f32 accumulation (padded lanes are zeros,
    # divisor is the true H*W so the mean is exact).
    pooled = jnp.sum(x.astype(jnp.float32), axis=-1) * inv_hw          # (block_b, C)

    # Excite: FC1 -> ReLU -> FC2 -> Hsigmoid (tiny MXU matmuls + VPU math).
    h = jnp.dot(pooled, w1_ref[...], preferred_element_type=jnp.float32)  # (block_b, Cr)
    h = jnp.maximum(h, 0.0)
    z = jnp.dot(h, w2_ref[...], preferred_element_type=jnp.float32)       # (block_b, C)
    z = jnp.clip(z + 3.0, 0.0, 6.0) * (1.0 / 6.0)                          # hsigmoid

    # Scale: broadcast gate over spatial dim; keep x in its native dtype.
    o_ref[...] = x * z[:, :, None].astype(x.dtype)


def se_module(x, w1, w2, *, vmem_slab_budget_bytes=6 * 1024 * 1024):
    """x: (B, C, H, W); w1: (C//r, C); w2: (C, C//r). Returns (B, C, H, W)."""
    B, C, H, W = x.shape
    Cr, C_in = w1.shape
    assert C_in == C and w2.shape == (C, Cr)

    HW = H * W
    HW_pad = ((HW + 127) // 128) * 128
    x_flat = x.reshape(B, C, HW)
    if HW_pad != HW:
        x_flat = jnp.pad(x_flat, ((0, 0), (0, 0), (0, HW_pad - HW)))

    # Size the batch block so double-buffered input + output slabs fit a
    # v7x-safe VMEM budget (~4 * slab <= ~24 MiB); bigger VMEM parts simply
    # see a shorter grid.
    itemsize = jnp.dtype(x.dtype).itemsize
    slab_bytes = C * HW_pad * itemsize
    # TODO(synk): if a single sample's C*HW slab ever exceeds the VMEM budget,
    # switch to a two-phase grid (accumulate pooled sums, then re-stream x).
    block_b = int(max(1, min(B, vmem_slab_budget_bytes // max(slab_bytes, 1))))
    nb = pl.cdiv(B, block_b)

    w1_t = w1.T.astype(jnp.float32)  # (C, Cr)
    w2_t = w2.T.astype(jnp.float32)  # (Cr, C)

    kernel = functools.partial(_se_kernel, inv_hw=1.0 / HW)

    out_flat = pl.pallas_call(
        kernel,
        out_shape=jax.ShapeDtypeStruct((B, C, HW_pad), x.dtype),
        grid=(nb,),
        in_specs=[
            pl.BlockSpec((block_b, C, HW_pad), lambda i: (i, 0, 0)),
            pl.BlockSpec((C, Cr), lambda i: (0, 0)),
            pl.BlockSpec((Cr, C), lambda i: (0, 0)),
        ],
        out_specs=pl.BlockSpec((block_b, C, HW_pad), lambda i: (i, 0, 0)),
        compiler_params=pltpu.CompilerParams(
            dimension_semantics=("parallel",),
            vmem_limit_bytes=48 * 1024 * 1024,
        ),
    )(x_flat, w1_t, w2_t)

    if HW_pad != HW:
        out_flat = out_flat[:, :, :HW]
    return out_flat.reshape(B, C, H, W)


def se_module_ref(x, w1, w2):
    """Pure-JAX reference mirroring the PyTorch forward."""
    y = jnp.mean(x, axis=(2, 3))                 # (B, C)
    y = jnp.maximum(y @ w1.T, 0.0)               # (B, C//r)
    y = y @ w2.T                                 # (B, C)
    y = jnp.clip(y + 3.0, 0.0, 6.0) / 6.0        # hsigmoid
    return x * y[:, :, None, None]


if __name__ == "__main__":
    # Small shapes consistent with the module: B=2, C=4, H=W=16, reduction=4.
    B, C, H, W = 2, 4, 16, 16
    reduction = 4
    Cr = C // reduction

    key = jax.random.PRNGKey(0)
    kx, k1, k2 = jax.random.split(key, 3)

    x = jax.random.normal(kx, (B, C, H, W), dtype=jnp.float32)
    # Deterministic synthetic weights (Linear layers have no bias).
    w1 = jax.random.uniform(k1, (Cr, C), dtype=jnp.float32, minval=-0.5, maxval=0.5)
    w2 = jax.random.uniform(k2, (C, Cr), dtype=jnp.float32, minval=-0.5, maxval=0.5)

    out = jax.block_until_ready(se_module(x, w1, w2))
    ref = se_module_ref(x, w1, w2)

    assert out.shape == (B, C, H, W)
    assert jnp.allclose(out, ref, atol=1e-5, rtol=1e-5), "mismatch vs reference"
    print("KERNEL_OK")
</pallas_src>

<mosaic_0001>
module attributes {stable_mosaic.version = 11 : i64} {
  func.func @_se_kernel(%arg0: i32, %arg1: memref<2x4x256xf32, #tpu.memory_space<vmem>>, %arg2: memref<4x1xf32, #tpu.memory_space<vmem>>, %arg3: memref<1x4xf32, #tpu.memory_space<vmem>>, %arg4: memref<2x4x256xf32, #tpu.memory_space<vmem>>) attributes {dimension_semantics = [#tpu.dimension_semantics<parallel>], iteration_bounds = array<i64: 1>, scalar_prefetch = 0 : i64, scratch_operands = 0 : i64, tpu.core_type = #tpu.core_type<tc>, window_params = [{transform_indices = @transform_0, window_bounds = array<i64: 2, 4, 256>}, {pipeline_mode = #tpu.pipeline_mode<synchronous>, transform_indices = @transform_1, window_bounds = array<i64: 4, 1>}, {pipeline_mode = #tpu.pipeline_mode<synchronous>, transform_indices = @transform_2, window_bounds = array<i64: 1, 4>}, {transform_indices = @transform_3, window_bounds = array<i64: 2, 4, 256>}]} {
    %c0 = arith.constant 0 : index
    %c0_0 = arith.constant 0 : index
    %c0_1 = arith.constant 0 : index
    %0 = vector.load %arg1[%c0, %c0_0, %c0_1] : memref<2x4x256xf32, #tpu.memory_space<vmem>>, vector<2x4x256xf32>
    %cst = arith.constant dense<0.000000e+00> : vector<2x4xf32>
    %1 = vector.multi_reduction <add>, %0, %cst [2] : vector<2x4x256xf32> to vector<2x4xf32>
    %cst_2 = arith.constant 3.906250e-03 : f32
    %2 = vector.broadcast %cst_2 : f32 to vector<2x4xf32>
    %3 = arith.mulf %1, %2 : vector<2x4xf32>
    %c0_3 = arith.constant 0 : index
    %c0_4 = arith.constant 0 : index
    %4 = vector.load %arg2[%c0_3, %c0_4] : memref<4x1xf32, #tpu.memory_space<vmem>>, vector<4x1xf32>
    %cst_5 = arith.constant dense<0.000000e+00> : vector<2x1xf32>
    %5 = tpu.matmul %3, %4, %cst_5 {dimension_numbers = #tpu.dot_dimension_numbers<[1], [0], [0], [1], [0, 0, 1, 1], [], []>} : vector<2x4xf32>, vector<4x1xf32>, vector<2x1xf32> -> vector<2x1xf32>
    %cst_6 = arith.constant 0.000000e+00 : f32
    %6 = vector.broadcast %cst_6 : f32 to vector<2x1xf32>
    %7 = arith.maximumf %5, %6 : vector<2x1xf32>
    %c0_7 = arith.constant 0 : index
    %c0_8 = arith.constant 0 : index
    %8 = vector.load %arg3[%c0_7, %c0_8] : memref<1x4xf32, #tpu.memory_space<vmem>>, vector<1x4xf32>
    %cst_9 = arith.constant dense<0.000000e+00> : vector<2x4xf32>
    %9 = tpu.matmul %7, %8, %cst_9 {dimension_numbers = #tpu.dot_dimension_numbers<[1], [0], [0], [1], [0, 0, 1, 1], [], []>} : vector<2x1xf32>, vector<1x4xf32>, vector<2x4xf32> -> vector<2x4xf32>
    %cst_10 = arith.constant 3.000000e+00 : f32
    %10 = vector.broadcast %cst_10 : f32 to vector<2x4xf32>
    %11 = arith.addf %9, %10 : vector<2x4xf32>
    %cst_11 = arith.constant 0.000000e+00 : f32
    %cst_12 = arith.constant 6.000000e+00 : f32
    %12 = vector.broadcast %cst_11 : f32 to vector<2x4xf32>
    %13 = arith.maximumf %12, %11 : vector<2x4xf32>
    %14 = vector.broadcast %cst_12 : f32 to vector<2x4xf32>
    %15 = arith.minimumf %14, %13 : vector<2x4xf32>
    %cst_13 = arith.constant 0.166666672 : f32
    %16 = vector.broadcast %cst_13 : f32 to vector<2x4xf32>
    %17 = arith.mulf %15, %16 : vector<2x4xf32>
    %18 = vector.shape_cast %17 : vector<2x4xf32> to vector<2x4x1xf32>
    %19 = vector.broadcast %18 : vector<2x4x1xf32> to vector<2x4x256xf32>
    %20 = arith.mulf %0, %19 : vector<2x4x256xf32>
    %c0_14 = arith.constant 0 : index
    %c0_15 = arith.constant 0 : index
    %c0_16 = arith.constant 0 : index
    %21 = vector.load %arg4[%c0_14, %c0_15, %c0_16] : memref<2x4x256xf32, #tpu.memory_space<vmem>>, vector<2x4x256xf32>
    tpu.vector_store %arg4[%c0_14, %c0_15, %c0_16], %20 {strides = array<i32>} : memref<2x4x256xf32, #tpu.memory_space<vmem>>, vector<2x4x256xf32>,
    return
  }
  func.func @transform_0(%arg0: i32) -> (i32, i32, i32) {
    %c0_i32 = arith.constant 0 : i32
    %c0_i32_0 = arith.constant 0 : i32
    %c0_i32_1 = arith.constant 0 : i32
    return %arg0, %c0_i32, %c0_i32_0 : i32, i32, i32
  }
  func.func @transform_1(%arg0: i32) -> (i32, i32) {
    %c0_i32 = arith.constant 0 : i32
    %c0_i32_0 = arith.constant 0 : i32
    %c0_i32_1 = arith.constant 0 : i32
    return %c0_i32, %c0_i32_0 : i32, i32
  }
  func.func @transform_2(%arg0: i32) -> (i32, i32) {
    %c0_i32 = arith.constant 0 : i32
    %c0_i32_0 = arith.constant 0 : i32
    %c0_i32_1 = arith.constant 0 : i32
    return %c0_i32, %c0_i32_0 : i32, i32
  }
  func.func @transform_3(%arg0: i32) -> (i32, i32, i32) {
    %c0_i32 = arith.constant 0 : i32
    %c0_i32_0 = arith.constant 0 : i32
    %c0_i32_1 = arith.constant 0 : i32
    return %arg0, %c0_i32, %c0_i32_0 : i32, i32, i32
  }
}

</mosaic_0001>

<llo_original>
// kernel: tpu_custom_call.1
$region0: #{tpu_custom_call.1}
  #allocation0 [shape = 'u32[]', space=smem, size = 0x4, offset = 0x4, fixed_abs, tag = 'smem constant byte address 0x4 - core index']
  #allocation1 [shape = 'u32[144,128]{1,0:T(1,128)}', space=vmem, size = 0x12000, scoped, tag = 'internal scratch']
  %s0 = inlined_call_operand.hbm [shape: f32[2,4,256], index: 0, kind: input, shape index: {}]
  %s1 = inlined_call_operand.vmem [shape: f32[4,1], index: 1, kind: input, shape index: {}]
  %s2 = inlined_call_operand.vmem [shape: f32[1,4], index: 2, kind: input, shape index: {}]
  %s3 = inlined_call_operand.hbm [shape: f32[2,4,256], index: 3, kind: output, shape index: {}]
  %s4 = sld [smem:[#allocation0]]
  $region26: #{tpu_custom_call.1} parent=0
    _
  %s6 = ssub.s32 1, %s4
  %s7 = scalar_select 0, %s6, %s4
  $region1: #{tpu_custom_call.1} parent=0
    #allocation2 [shape = 'u8[8192]{0}', space=vmem, size = 0x2000, scoped, tag = 'input window, operand 0, single buffered']
    #allocation3 [shape = 's32[1]{0}', space=sflag, size = 0x4, scoped, tag = 'scoped memory for tpu_custom_call.1']
    #allocation4 [shape = 's32[1]{0}', space=sflag, size = 0x4, scoped, tag = 'scoped memory for tpu_custom_call.1']
    #allocation5 [shape = 'u8[8192]{0}', space=vmem, size = 0x2000, scoped, tag = 'output window, operand 0, single buffered']
    %8 = vsyncpa [#allocation3], 0
    %9 = vsyncpa [#allocation4], 0
    // Predicated region
    $region2: #{tpu_custom_call.1} parent=1 // pred_check
      _
    $region3: #{tpu_custom_call.1} parent=1 // pred_check_branch
      %11 = sbr.rel (0) target = $region5
    $region4: #{tpu_custom_call.1} parent=1 // pred_region
      %s13 = ssub.s32 256, 256
      %14 = vsyncadd [#allocation3], %s13
      %s15 = sshll.u32 [#allocation2], 4
      %s16 = int_to_ptr.vmem [resolvable:$true] %s15
      %21 = dma.hbm_to_vmem [thread:$0]  %s0, 256, %s16, [#allocation3], 128, 128, 8
    $region5: #{tpu_custom_call.1} parent=1 // pred_fallthru
      _
    // Predicated region
    $region6: #{tpu_custom_call.1} parent=1 // pred_check
      _
    $region7: #{tpu_custom_call.1} parent=1 // pred_check_branch
      %23 = sbr.rel (0) target = $region9
    $region8: #{tpu_custom_call.1} parent=1 // pred_region
      _
    $region9: #{tpu_custom_call.1} parent=1 // pred_fallthru
      _
    // Predicated region
    $region10: #{tpu_custom_call.1} parent=1 // pred_check
      _
    $region11: #{tpu_custom_call.1} parent=1 // pred_check_branch
      %25 = sbr.rel (0) target = $region13
    $region12: #{tpu_custom_call.1} parent=1 // pred_region
      _
    $region13: #{tpu_custom_call.1} parent=1 // pred_fallthru
      _
    // Predicated region
    $region14: #{tpu_custom_call.1} parent=1 // pred_check
      _
    $region15: #{tpu_custom_call.1} parent=1 // pred_check_branch
      %27 = sbr.rel (0) target = $region17
    $region16: #{tpu_custom_call.1} parent=1 // pred_region
      %28 = dma.done [#allocation3], 256
    $region17: #{tpu_custom_call.1} parent=1 // pred_fallthru
      _
    %v29 = vld [vmem:[#allocation2] sm:$0xff]
    %v30 = vld [vmem:[#allocation2 + $0x8] sm:$0xff]
    %v33 = vcombine.high %v29, %v29
    %v34 = vcombine.high %v30, %v30
    %vm37 = vcmask 1043456
    %v38 = vsel %vm37, %v29, 0.0
    %v39 = vsel %vm37, %v33, 0.0
    %v40 = vadd.f32 %v38, %v39
    %41 = vadd.xlane.f32.xlu0 %v40
    %v42 = vpop.xlane.xlu0 %41
    %v43 = vsel %vm37, %v30, 0.0
    %v44 = vsel %vm37, %v34, 0.0
    %v45 = vadd.f32 %v43, %v44
    %46 = vadd.xlane.f32.xlu0 %v45
    %v47 = vpop.xlane.xlu0 %46
    %v48 = vmul.f32 %v42, 0.00390625
    %v49 = vmul.f32 %v47, 0.00390625
    %v50 = vld [vmem:[%s1] sm:$0xf]
    %v53 = vlaneseq
    %v54 = vand.u32 %v53, 127
    %v55 = vlaneseq
    %v56 = vshrl.u32 %v55, 7
    %v57 = vsub.s32 %v54, %v56
    %v58 = vrot.slane %v48, %v57
    %v59 = vlaneseq
    %v60 = vshrl.u32 %v59, 7
    %v61 = vsub.s32 %v54, %v60
    %v62 = vrot.slane %v49, %v61
    %vm63 = vcmask 1041409
    %v64 = vsel %vm63, %v62, %v58
    %vm65 = vcmask 31744
    %v66 = vsel %vm65, %v64, 0
    %v69 = vsel %vm37, %v50, 0
    %71 = vmatprep.subr.mxu0 0.0
    %72 = vmatpush1.msra.mxu0 0.0
    %73 = vmatprep.subr.mxu0 0.0
    %74 = vmatpush1.msra.mxu0 0.0
    %75 = vmatprep.subr.mxu0 0.0
    %76 = vmatpush1.msra.mxu0 0.0
    %77 = vmatprep.subr.mxu0 0.0
    %78 = vmatpush1.msra.mxu0 0.0
    %79 = vmatprep.subr.mxu0 0.0
    %80 = vmatpush1.msra.mxu0 0.0
    %81 = vmatprep.subr.mxu0 0.0
    %82 = vmatpush1.msra.mxu0 0.0
    %83 = vmatprep.subr.mxu0 0.0
    %84 = vmatpush1.msra.mxu0 0.0
    %85 = vmatprep.subr.mxu0 0.0
    %86 = vmatpush1.msra.mxu0 0.0
    %87 = vmatprep.subr.mxu0 0.0
    %88 = vmatpush1.msra.mxu0 0.0
    %89 = vmatprep.subr.mxu0 0.0
    %90 = vmatpush1.msra.mxu0 0.0
    %91 = vmatprep.subr.mxu0 0.0
    %92 = vmatpush1.msra.mxu0 0.0
    %93 = vmatprep.subr.mxu0 0.0
    %94 = vmatpush1.msra.mxu0 0.0
    %95 = vmatprep.subr.mxu0 0.0
    %96 = vmatpush1.msra.mxu0 0.0
    %97 = vmatprep.subr.mxu0 0.0
    %98 = vmatpush1.msra.mxu0 0.0
    %99 = vmatprep.subr.mxu0 0.0
    %100 = vmatpush1.msra.mxu0 0.0
    %101 = vmatprep.subr.mxu0 0.0
    %102 = vmatpush1.msra.mxu0 %v69
    %103 = vmatprep.subr.mxu0 0.0
    %104 = vmatpush2.msra.mxu0 0.0
    %105 = vmatprep.subr.mxu0 0.0
    %106 = vmatpush2.msra.mxu0 0.0
    %107 = vmatprep.subr.mxu0 0.0
    %108 = vmatpush2.msra.mxu0 0.0
    %109 = vmatprep.subr.mxu0 0.0
    %110 = vmatpush2.msra.mxu0 0.0
    %111 = vmatprep.subr.mxu0 0.0
    %112 = vmatpush2.msra.mxu0 0.0
    %113 = vmatprep.subr.mxu0 0.0
    %114 = vmatpush2.msra.mxu0 0.0
    %115 = vmatprep.subr.mxu0 0.0
    %116 = vmatpush2.msra.mxu0 0.0
    %117 = vmatprep.subr.mxu0 0.0
    %118 = vmatpush2.msra.mxu0 0.0
    %119 = vmatprep.subr.mxu0 0.0
    %120 = vmatpush2.msra.mxu0 0.0
    %121 = vmatprep.subr.mxu0 0.0
    %122 = vmatpush2.msra.mxu0 0.0
    %123 = vmatprep.subr.mxu0 0.0
    %124 = vmatpush2.msra.mxu0 0.0
    %125 = vmatprep.subr.mxu0 0.0
    %126 = vmatpush2.msra.mxu0 0.0
    %127 = vmatprep.subr.mxu0 0.0
    %128 = vmatpush2.msra.mxu0 0.0
    %129 = vmatprep.subr.mxu0 0.0
    %130 = vmatpush2.msra.mxu0 0.0
    %131 = vmatprep.subr.mxu0 0.0
    %132 = vmatpush2.msra.mxu0 0.0
    %133 = vmatprep.subr.mxu0 0.0
    %134 = vmatpush2.msra.mxu0 0.0
    %135 = vmatprep.mubr.f32.mxu0 0.0
    %136 = vmatmul.mubr.f32.gmra.mxu0 %v66
    %v137 = vpop.f32.mrf.mxu0
    %v138 = vadd.f32 0.0, %v137
    %v139 = vpop.f32.mrf.mxu0
    %140 = vdwg.mxu0
    %v141 = vmax.f32 %v138, 0.0
    %v142 = vld [vmem:[%s2] sm:$0x1]
    %vm143 = vcmask 7168
    %v145 = vsel %vm143, %v141, 0
    %vm147 = vcmask 1040384
    %v149 = vsel %vm147, %v142, 0
    %151 = vmatprep.subr.mxu0 0.0
    %152 = vmatpush1.msra.mxu0 0.0
    %153 = vmatprep.subr.mxu0 0.0
    %154 = vmatpush1.msra.mxu0 0.0
    %155 = vmatprep.subr.mxu0 0.0
    %156 = vmatpush1.msra.mxu0 0.0
    %157 = vmatprep.subr.mxu0 0.0
    %158 = vmatpush1.msra.mxu0 0.0
    %159 = vmatprep.subr.mxu0 0.0
    %160 = vmatpush1.msra.mxu0 0.0
    %161 = vmatprep.subr.mxu0 0.0
    %162 = vmatpush1.msra.mxu0 0.0
    %163 = vmatprep.subr.mxu0 0.0
    %164 = vmatpush1.msra.mxu0 0.0
    %165 = vmatprep.subr.mxu0 0.0
    %166 = vmatpush1.msra.mxu0 0.0
    %167 = vmatprep.subr.mxu0 0.0
    %168 = vmatpush1.msra.mxu0 0.0
    %169 = vmatprep.subr.mxu0 0.0
    %170 = vmatpush1.msra.mxu0 0.0
    %171 = vmatprep.subr.mxu0 0.0
    %172 = vmatpush1.msra.mxu0 0.0
    %173 = vmatprep.subr.mxu0 0.0
    %174 = vmatpush1.msra.mxu0 0.0
    %175 = vmatprep.subr.mxu0 0.0
    %176 = vmatpush1.msra.mxu0 0.0
    %177 = vmatprep.subr.mxu0 0.0
    %178 = vmatpush1.msra.mxu0 0.0
    %179 = vmatprep.subr.mxu0 0.0
    %180 = vmatpush1.msra.mxu0 0.0
    %181 = vmatprep.subr.mxu0 0.0
    %182 = vmatpush1.msra.mxu0 %v149
    %183 = vmatprep.subr.mxu0 0.0
    %184 = vmatpush2.msra.mxu0 0.0
    %185 = vmatprep.subr.mxu0 0.0
    %186 = vmatpush2.msra.mxu0 0.0
    %187 = vmatprep.subr.mxu0 0.0
    %188 = vmatpush2.msra.mxu0 0.0
    %189 = vmatprep.subr.mxu0 0.0
    %190 = vmatpush2.msra.mxu0 0.0
    %191 = vmatprep.subr.mxu0 0.0
    %192 = vmatpush2.msra.mxu0 0.0
    %193 = vmatprep.subr.mxu0 0.0
    %194 = vmatpush2.msra.mxu0 0.0
    %195 = vmatprep.subr.mxu0 0.0
    %196 = vmatpush2.msra.mxu0 0.0
    %197 = vmatprep.subr.mxu0 0.0
    %198 = vmatpush2.msra.mxu0 0.0
    %199 = vmatprep.subr.mxu0 0.0
    %200 = vmatpush2.msra.mxu0 0.0
    %201 = vmatprep.subr.mxu0 0.0
    %202 = vmatpush2.msra.mxu0 0.0
    %203 = vmatprep.subr.mxu0 0.0
    %204 = vmatpush2.msra.mxu0 0.0
    %205 = vmatprep.subr.mxu0 0.0
    %206 = vmatpush2.msra.mxu0 0.0
    %207 = vmatprep.subr.mxu0 0.0
    %208 = vmatpush2.msra.mxu0 0.0
    %209 = vmatprep.subr.mxu0 0.0
    %210 = vmatpush2.msra.mxu0 0.0
    %211 = vmatprep.subr.mxu0 0.0
    %212 = vmatpush2.msra.mxu0 0.0
    %213 = vmatprep.subr.mxu0 0.0
    %214 = vmatpush2.msra.mxu0 0.0
    %215 = vmatprep.mubr.f32.mxu0 0.0
    %216 = vmatmul.mubr.f32.gmra.mxu0 %v145
    %v217 = vpop.f32.mrf.mxu0
    %v218 = vadd.f32 3.0, %v217
    %v219 = vpop.f32.mrf.mxu0
    %220 = vdwg.mxu0
    %v221 = vmax.f32 %v218, 0.0
    %v222 = vmin.f32 %v221, 6.0
    %v223 = vmul.f32 %v222, 0.16666667
    %v224 = vlaneseq
    %v225 = vshrl.u32 %v224, 7
    %v226 = vsub.s32 0, %v225
    %v227 = vrot.slane %v223, %v226
    %229 = vbcast.lane.b32.xlu0 %v227, 256
    %v230 = vpop.permute.xlu0 %229
    %v231 = vlaneseq
    %v232 = vshrl.u32 %v231, 7
    %v233 = vsub.s32 1, %v232
    %v234 = vrot.slane %v223, %v233
    %236 = vbcast.lane.b32.xlu0 %v234, 256
    %v237 = vpop.permute.xlu0 %236
    %v241 = vunpack.c.l.s4 839922192
    %v242 = vunpack.c.0.s8 %v241
    %v243 = vlaneseq
    %v244 = vshrl.u32 %v243, 7
    %v245 = vsub.s32 %v242, %v244
    %v246 = vrot.slane %v230, %v245
    %v248 = vunpack.c.l.s4 839922192
    %v249 = vunpack.c.0.s8 %v248
    %v250 = vlaneseq
    %v251 = vshrl.u32 %v250, 7
    %v252 = vsub.s32 %v249, %v251
    %v253 = vrot.slane %v237, %v252
    %v256 = vmul.f32 %v29, %v246
    %v257 = vmul.f32 %v30, %v253
    %258 = vst [vmem:[#allocation5] sm:$0xff] %v256
    %259 = vst [vmem:[#allocation5 + $0x8] sm:$0xff] %v257
    // Predicated region
    $region18: #{tpu_custom_call.1} parent=1 // pred_check
      _
    $region19: #{tpu_custom_call.1} parent=1 // pred_check_branch
      %261 = sbr.rel (0) target = $region21
    $region20: #{tpu_custom_call.1} parent=1 // pred_region
      %s263 = ssub.s32 256, 256
      %264 = vsyncadd [#allocation4], %s263
      %s265 = sshll.u32 [#allocation5], 4
      %s266 = int_to_ptr.vmem [resolvable:$true] %s265
      %271 = dma.vmem_to_hbm [thread:$0]  %s266, 256, %s3, [#allocation4], 128, 128, 8
    $region21: #{tpu_custom_call.1} parent=1 // pred_fallthru
      _
    // Predicated region
    $region22: #{tpu_custom_call.1} parent=1 // pred_check
      _
    $region23: #{tpu_custom_call.1} parent=1 // pred_check_branch
      %273 = sbr.rel (0) target = $region25
    $region24: #{tpu_custom_call.1} parent=1 // pred_region
      %274 = dma.done [#allocation4], 256
    $region25: #{tpu_custom_call.1} parent=1 // pred_fallthru
      _
    %275 = vsyncpa [#allocation3], 1
    %276 = vsyncpa [#allocation4], 1

</llo_original>
